<compile_context>
chip_gen: v7x
topology: tpu7x:2x2x1
jax: 0.10.0
libtpu: 0.0.40
codegen_flags: <defaults>
</compile_context>

<pallas_src>
import functools

import jax
import jax.numpy as jnp
from jax.experimental import pallas as pl
from jax.experimental.pallas import tpu as pltpu


def _linear_kernel(x_ref, w_ref, b_ref, out_ref):
    # action_mean tile = x_tile @ W + b   (MXU matmul, f32 accumulate).
    out_ref[...] = (
        jnp.dot(x_ref[...], w_ref[...], preferred_element_type=jnp.float32)
        + b_ref[...]
    ).astype(out_ref.dtype)


def prepare_params(weight, bias, logstd, *, use_bf16=False):
    """One-time parameter prep (hoisted out of the per-call hot path).

    weight: (num_outputs, num_inputs)  PyTorch nn.Linear layout
    bias:   (num_outputs,)
    logstd: (num_outputs - D,)

    Returns (w_t, b_row, std_row):
      w_t     (num_inputs, num_outputs)  pre-transposed for x @ W on the MXU
      b_row   (1, num_outputs)
      std_row (1, num_outputs - D)       exp(logstd), batch-independent
    """
    w_t = weight.T
    if use_bf16:
        w_t = w_t.astype(jnp.bfloat16)
    b_row = bias.reshape(1, -1).astype(jnp.float32)
    std_row = jnp.exp(logstd).reshape(1, -1).astype(jnp.float32)
    return w_t, b_row, std_row


def discrete_continuous_dist_forward(x, w_t, b_row, std_row, discrete_action_dim,
                                     *, block_b=512, use_bf16=False):
    """Returns (discrete_logits, continuous_mean, continuous_std_row).

    x:       (B, num_inputs)
    w_t:     (num_inputs, num_outputs)   pre-transposed weight (from prepare_params)
    b_row:   (1, num_outputs)
    std_row: (1, num_outputs - D)        exp(logstd); broadcast over batch is lazy
    """
    B, K = x.shape
    N = w_t.shape[1]
    D = discrete_action_dim

    if use_bf16:
        x = x.astype(jnp.bfloat16)
        w_t = w_t.astype(jnp.bfloat16)

    # Batch tile: whole batch if small, else a multiple-of-8 tile (software
    # pipelined; weight/bias stay resident across the grid).
    if B <= block_b:
        tm = B
    else:
        tm = block_b - (block_b % 8) if block_b % 8 else block_b
    grid = (pl.cdiv(B, tm),)

    cost = pl.CostEstimate(
        flops=2 * B * K * N,
        transcendentals=0,
        bytes_accessed=x.size * x.dtype.itemsize
        + w_t.size * w_t.dtype.itemsize
        + b_row.size * b_row.dtype.itemsize
        + B * N * 4,
    )

    action_mean = pl.pallas_call(
        _linear_kernel,
        out_shape=jax.ShapeDtypeStruct((B, N), jnp.float32),
        grid_spec=pltpu.PrefetchScalarGridSpec(
            num_scalar_prefetch=0,
            grid=grid,
            in_specs=[
                pl.BlockSpec((tm, K), lambda i: (i, 0)),   # x tile
                pl.BlockSpec((K, N), lambda i: (0, 0)),    # weight, full resident
                pl.BlockSpec((1, N), lambda i: (0, 0)),    # bias row, full resident
            ],
            out_specs=pl.BlockSpec((tm, N), lambda i: (i, 0)),
        ),
        compiler_params=pltpu.CompilerParams(
            dimension_semantics=("parallel",),
        ),
        cost_estimate=cost,
    )(x, w_t, b_row)

    # Free slicing in the wrapper (single lane-contiguous kernel output).
    discrete_logits = action_mean[:, :D]
    continuous_mean = action_mean[:, D:]
    # std is batch-independent; returned as (1, C) — consumers broadcast lazily.
    return discrete_logits, continuous_mean, std_row


def _orthogonal_weight(key, out_dim, in_dim):
    # Deterministic orthogonal init (matches nn.init.orthogonal_ semantics).
    return jax.nn.initializers.orthogonal()(key, (out_dim, in_dim), jnp.float32)


if __name__ == "__main__":
    # Module hyper-parameters (small, consistent with the forward).
    num_inputs = 32
    num_outputs = 16
    discrete_action_dim = 8
    batch = 8
    C = num_outputs - discrete_action_dim

    key = jax.random.PRNGKey(0)
    k_x, k_w = jax.random.split(key)

    # Deterministic parameter init per __init__:
    #   fc_mean: orthogonal weight, zero bias; logstd: zeros.
    weight = _orthogonal_weight(k_w, num_outputs, num_inputs)
    bias = jnp.zeros((num_outputs,), jnp.float32)
    logstd = jnp.zeros((C,), jnp.float32)

    x = jax.random.normal(k_x, (batch, num_inputs), jnp.float32)

    # One-time parameter prep (transpose + exp(logstd) hoisted out of hot path).
    w_t, b_row, std_row = prepare_params(weight, bias, logstd)

    logits, cont_mean, cont_std_row = jax.block_until_ready(
        discrete_continuous_dist_forward(
            x, w_t, b_row, std_row, discrete_action_dim
        )
    )

    # Pure-JAX reference check.
    ref_mean_all = x @ weight.T + bias
    ref_logits = ref_mean_all[:, :discrete_action_dim]
    ref_cmean = ref_mean_all[:, discrete_action_dim:]
    ref_cstd = jnp.broadcast_to(jnp.exp(logstd)[None, :], (batch, C))

    cont_std = jnp.broadcast_to(cont_std_row, (batch, C))  # lazy broadcast by consumer

    assert logits.shape == (batch, discrete_action_dim)
    assert cont_mean.shape == (batch, C)
    assert cont_std.shape == (batch, C)
    assert jnp.allclose(logits, ref_logits, atol=1e-5)
    assert jnp.allclose(cont_mean, ref_cmean, atol=1e-5)
    assert jnp.allclose(cont_std, ref_cstd, atol=1e-5)

    # TODO(synk): the OneHotDist / FixedSplitDist objects (sampling, log_prob,
    # entropy) are distribution containers, not forward-pass compute; the kernel
    # emits their parameters (logits, mean, std).
    print("KERNEL_OK")
</pallas_src>

<mosaic_0001>
module attributes {stable_mosaic.version = 11 : i64} {
  func.func @_linear_kernel(%arg0: i32, %arg1: memref<8x32xf32, #tpu.memory_space<vmem>>, %arg2: memref<32x16xf32, #tpu.memory_space<vmem>>, %arg3: memref<1x16xf32, #tpu.memory_space<vmem>>, %arg4: memref<8x16xf32, #tpu.memory_space<vmem>>) attributes {dimension_semantics = [#tpu.dimension_semantics<parallel>], iteration_bounds = array<i64: 1>, scalar_prefetch = 0 : i64, scratch_operands = 0 : i64, tpu.core_type = #tpu.core_type<tc>, window_params = [{transform_indices = @transform_0, window_bounds = array<i64: 8, 32>}, {pipeline_mode = #tpu.pipeline_mode<synchronous>, transform_indices = @transform_1, window_bounds = array<i64: 32, 16>}, {pipeline_mode = #tpu.pipeline_mode<synchronous>, transform_indices = @transform_2, window_bounds = array<i64: 1, 16>}, {transform_indices = @transform_3, window_bounds = array<i64: 8, 16>}]} {
    %c0 = arith.constant 0 : index
    %c0_0 = arith.constant 0 : index
    %0 = vector.load %arg1[%c0, %c0_0] : memref<8x32xf32, #tpu.memory_space<vmem>>, vector<8x32xf32>
    %c0_1 = arith.constant 0 : index
    %c0_2 = arith.constant 0 : index
    %1 = vector.load %arg2[%c0_1, %c0_2] : memref<32x16xf32, #tpu.memory_space<vmem>>, vector<32x16xf32>
    %cst = arith.constant dense<0.000000e+00> : vector<8x16xf32>
    %2 = tpu.matmul %0, %1, %cst {dimension_numbers = #tpu.dot_dimension_numbers<[1], [0], [0], [1], [0, 0, 1, 1], [], []>} : vector<8x32xf32>, vector<32x16xf32>, vector<8x16xf32> -> vector<8x16xf32>
    %c0_3 = arith.constant 0 : index
    %c0_4 = arith.constant 0 : index
    %3 = vector.load %arg3[%c0_3, %c0_4] : memref<1x16xf32, #tpu.memory_space<vmem>>, vector<1x16xf32>
    %4 = vector.broadcast %3 : vector<1x16xf32> to vector<8x16xf32>
    %5 = arith.addf %2, %4 : vector<8x16xf32>
    %c0_5 = arith.constant 0 : index
    %c0_6 = arith.constant 0 : index
    %6 = vector.load %arg4[%c0_5, %c0_6] : memref<8x16xf32, #tpu.memory_space<vmem>>, vector<8x16xf32>
    tpu.vector_store %arg4[%c0_5, %c0_6], %5 {strides = array<i32>} : memref<8x16xf32, #tpu.memory_space<vmem>>, vector<8x16xf32>,
    return
  }
  func.func @transform_0(%arg0: i32) -> (i32, i32) {
    %c0_i32 = arith.constant 0 : i32
    %c0_i32_0 = arith.constant 0 : i32
    return %arg0, %c0_i32 : i32, i32
  }
  func.func @transform_1(%arg0: i32) -> (i32, i32) {
    %c0_i32 = arith.constant 0 : i32
    %c0_i32_0 = arith.constant 0 : i32
    %c0_i32_1 = arith.constant 0 : i32
    return %c0_i32, %c0_i32_0 : i32, i32
  }
  func.func @transform_2(%arg0: i32) -> (i32, i32) {
    %c0_i32 = arith.constant 0 : i32
    %c0_i32_0 = arith.constant 0 : i32
    %c0_i32_1 = arith.constant 0 : i32
    return %c0_i32, %c0_i32_0 : i32, i32
  }
  func.func @transform_3(%arg0: i32) -> (i32, i32) {
    %c0_i32 = arith.constant 0 : i32
    %c0_i32_0 = arith.constant 0 : i32
    return %arg0, %c0_i32 : i32, i32
  }
}

</mosaic_0001>

<llo_original>
// kernel: tpu_custom_call.1
$region0: #{tpu_custom_call.1}
  #allocation0 [shape = 'u32[]', space=smem, size = 0x4, offset = 0x4, fixed_abs, tag = 'smem constant byte address 0x4 - core index']
  #allocation1 [shape = 'u32[144,128]{1,0:T(1,128)}', space=vmem, size = 0x12000, scoped, tag = 'internal scratch']
  %s0 = inlined_call_operand.vmem [shape: f32[8,32], index: 0, kind: input, shape index: {}]
  %s1 = inlined_call_operand.vmem [shape: f32[32,16], index: 1, kind: input, shape index: {}]
  %s2 = inlined_call_operand.vmem [shape: f32[1,16], index: 2, kind: input, shape index: {}]
  %s3 = inlined_call_operand.hbm [shape: f32[8,16], index: 3, kind: output, shape index: {}]
  %s4 = sld [smem:[#allocation0]]
  $region22: #{tpu_custom_call.1} parent=0
    _
  %s6 = ssub.s32 1, %s4
  %s7 = scalar_select 0, %s6, %s4
  $region1: #{tpu_custom_call.1} parent=0
    #allocation2 [shape = 'u8[4096]{0}', space=vmem, size = 0x1000, scoped, tag = 'output window, operand 0, single buffered']
    #allocation3 [shape = 's32[1]{0}', space=sflag, size = 0x4, scoped, tag = 'scoped memory for tpu_custom_call.1']
    %8 = vsyncpa [#allocation3], 0
    // Predicated region
    $region2: #{tpu_custom_call.1} parent=1 // pred_check
      _
    $region3: #{tpu_custom_call.1} parent=1 // pred_check_branch
      %10 = sbr.rel (0) target = $region5
    $region4: #{tpu_custom_call.1} parent=1 // pred_region
      _
    $region5: #{tpu_custom_call.1} parent=1 // pred_fallthru
      _
    // Predicated region
    $region6: #{tpu_custom_call.1} parent=1 // pred_check
      _
    $region7: #{tpu_custom_call.1} parent=1 // pred_check_branch
      %12 = sbr.rel (0) target = $region9
    $region8: #{tpu_custom_call.1} parent=1 // pred_region
      _
    $region9: #{tpu_custom_call.1} parent=1 // pred_fallthru
      _
    // Predicated region
    $region10: #{tpu_custom_call.1} parent=1 // pred_check
      _
    $region11: #{tpu_custom_call.1} parent=1 // pred_check_branch
      %14 = sbr.rel (0) target = $region13
    $region12: #{tpu_custom_call.1} parent=1 // pred_region
      _
    $region13: #{tpu_custom_call.1} parent=1 // pred_fallthru
      _
    %v15 = vld [vmem:[%s0] sm:$0xff]
    %v16 = vld [vmem:[%s1] sm:$0xff]
    %v17 = vld [vmem:[%s1 + $0x8] sm:$0xff]
    %v18 = vld [vmem:[%s1 + $0x10] sm:$0xff]
    %v19 = vld [vmem:[%s1 + $0x18] sm:$0xff]
    %v20 = vld [vmem:[%s2] sm:$0x1]
    %v22 = vlaneseq
    %v23 = vshrl.u32 %v22, 7
    %v24 = vsub.s32 0, %v23
    %v25 = vrot.slane %v20, %v24
    %vm27 = vcmask 261120
    %v29 = vsel %vm27, %v15, 0
    %31 = vmatprep.subr.mxu0 0.0
    %32 = vmatpush1.msra.mxu0 %v16
    %33 = vmatprep.subr.mxu0 0.0
    %34 = vmatpush1.msra.mxu0 %v17
    %35 = vmatprep.subr.mxu0 0.0
    %36 = vmatpush1.msra.mxu0 %v18
    %37 = vmatprep.subr.mxu0 0.0
    %38 = vmatpush1.msra.mxu0 %v19
    %39 = vmatprep.subr.mxu0 0.0
    %40 = vmatpush1.msra.mxu0 0.0
    %41 = vmatprep.subr.mxu0 0.0
    %42 = vmatpush1.msra.mxu0 0.0
    %43 = vmatprep.subr.mxu0 0.0
    %44 = vmatpush1.msra.mxu0 0.0
    %45 = vmatprep.subr.mxu0 0.0
    %46 = vmatpush1.msra.mxu0 0.0
    %47 = vmatprep.subr.mxu0 0.0
    %48 = vmatpush1.msra.mxu0 0.0
    %49 = vmatprep.subr.mxu0 0.0
    %50 = vmatpush1.msra.mxu0 0.0
    %51 = vmatprep.subr.mxu0 0.0
    %52 = vmatpush1.msra.mxu0 0.0
    %53 = vmatprep.subr.mxu0 0.0
    %54 = vmatpush1.msra.mxu0 0.0
    %55 = vmatprep.subr.mxu0 0.0
    %56 = vmatpush1.msra.mxu0 0.0
    %57 = vmatprep.subr.mxu0 0.0
    %58 = vmatpush1.msra.mxu0 0.0
    %59 = vmatprep.subr.mxu0 0.0
    %60 = vmatpush1.msra.mxu0 0.0
    %61 = vmatprep.subr.mxu0 0.0
    %62 = vmatpush1.msra.mxu0 0.0
    %63 = vmatprep.subr.mxu0 0.0
    %64 = vmatpush1.msra.mxu0 0.0
    %65 = vmatprep.subr.mxu0 0.0
    %66 = vmatpush1.msra.mxu0 0.0
    %67 = vmatprep.subr.mxu0 0.0
    %68 = vmatpush1.msra.mxu0 0.0
    %69 = vmatprep.subr.mxu0 0.0
    %70 = vmatpush1.msra.mxu0 0.0
    %71 = vmatprep.subr.mxu0 0.0
    %72 = vmatpush1.msra.mxu0 0.0
    %73 = vmatprep.subr.mxu0 0.0
    %74 = vmatpush1.msra.mxu0 0.0
    %75 = vmatprep.subr.mxu0 0.0
    %76 = vmatpush1.msra.mxu0 0.0
    %77 = vmatprep.subr.mxu0 0.0
    %78 = vmatpush1.msra.mxu0 0.0
    %79 = vmatprep.subr.mxu0 0.0
    %80 = vmatpush1.msra.mxu0 0.0
    %81 = vmatprep.subr.mxu0 0.0
    %82 = vmatpush1.msra.mxu0 0.0
    %83 = vmatprep.subr.mxu0 0.0
    %84 = vmatpush1.msra.mxu0 0.0
    %85 = vmatprep.subr.mxu0 0.0
    %86 = vmatpush1.msra.mxu0 0.0
    %87 = vmatprep.subr.mxu0 0.0
    %88 = vmatpush1.msra.mxu0 0.0
    %89 = vmatprep.subr.mxu0 0.0
    %90 = vmatpush1.msra.mxu0 0.0
    %91 = vmatprep.subr.mxu0 0.0
    %92 = vmatpush1.msra.mxu0 0.0
    %93 = vmatprep.subr.mxu0 0.0
    %94 = vmatpush1.msra.mxu0 0.0
    %95 = vmatprep.mubr.f32.mxu0 0.0
    %96 = vmatmul.mubr.f32.gmra.mrb[0].mxu0 %v29
    %v97 = vpop.f32.mrb[0].mxu0
    %v98 = vadd.f32 %v25, %v97
    %v99 = vpop.f32.mrb[0].mxu0
    %100 = vdwg.mxu0
    %vm101 = vcmask 130048
    %102 = vst.msk [vmem:[#allocation2] sm:$0xff] %vm101, %v98
    // Predicated region
    $region14: #{tpu_custom_call.1} parent=1 // pred_check
      _
    $region15: #{tpu_custom_call.1} parent=1 // pred_check_branch
      %104 = sbr.rel (0) target = $region17
    $region16: #{tpu_custom_call.1} parent=1 // pred_region
      %s106 = ssub.s32 128, 128
      %107 = vsyncadd [#allocation3], %s106
      %s109 = sshll.u32 [#allocation2], 4
      %s110 = int_to_ptr.vmem [resolvable:$true] %s109
      %112 = dma.vmem_to_hbm [thread:$0]  %s110, 128, %s3, [#allocation3]
    $region17: #{tpu_custom_call.1} parent=1 // pred_fallthru
      _
    // Predicated region
    $region18: #{tpu_custom_call.1} parent=1 // pred_check
      _
    $region19: #{tpu_custom_call.1} parent=1 // pred_check_branch
      %114 = sbr.rel (0) target = $region21
    $region20: #{tpu_custom_call.1} parent=1 // pred_region
      %115 = dma.done [#allocation3], 128
    $region21: #{tpu_custom_call.1} parent=1 // pred_fallthru
      _
    %116 = vsyncpa [#allocation3], 1

</llo_original>
